<compile_context>
chip_gen: v7x
topology: tpu7x:2x2x1
jax: 0.10.0
libtpu: 0.0.40
codegen_flags: <defaults>
</compile_context>

<pallas_src>
import functools
import math

import jax
import jax.numpy as jnp
import numpy as np
from jax.experimental import pallas as pl
from jax.experimental.pallas import tpu as pltpu


def make_encoding(d_model: int, max_len: int = 5000) -> jnp.ndarray:
    """Deterministic sinusoidal table, identical to the torch __init__ (odd d_model)."""
    position = jnp.arange(0, max_len, dtype=jnp.float32)[:, None]          # (max_len, 1)
    div_term = jnp.exp(
        jnp.arange(0, d_model, 2, dtype=jnp.float32) * (-math.log(10000.0) / d_model)
    )
    enc = jnp.zeros((max_len, d_model), dtype=jnp.float32)
    enc = enc.at[:, 0::2].set(jnp.sin(position * div_term))
    if d_model > 1:
        enc = enc.at[:, 1::2].set(jnp.cos(position * div_term[:-1]))
    return enc


def _pe_kernel(x_ref, enc_ref, o_ref, *, d):
    """x_ref: (TB, TC) flattened activations; enc_ref: (1, TC) positional slab."""
    x = x_ref[...]
    enc = enc_ref[...]
    # Main body: one dense add, one unmasked full-tile (lane-dense) store.
    o_ref[...] = (x.astype(enc.dtype) + enc).astype(o_ref.dtype)

    # Last-row fix only on the final chunk of the flattened (L*D) axis:
    # out[..., L-1, :] must source from x[..., L-2, :] (faithful off-by-one).
    @pl.when(pl.program_id(1) == pl.num_programs(1) - 1)
    def _():
        tc = o_ref.shape[-1]
        src = x_ref[:, pl.ds(tc - 2 * d, d)]          # flattened row L-2
        e1 = enc_ref[:, pl.ds(tc - d, d)]             # slab already holds enc[1] there
        o_ref[:, pl.ds(tc - d, d)] = (src.astype(e1.dtype) + e1).astype(o_ref.dtype)


def _vmem_capacity_bytes() -> int:
    try:
        return int(pltpu.get_tpu_info().vmem_capacity_bytes)
    except Exception:
        return 64 * 1024 * 1024          # conservative default (v7x-sized VMEM per TC)


def _pick_tiles(Bf, LD, D, in_item, out_item, vmem_cap):
    """Pick (TB, TC) for blocks of the flattened (Bf, L*D) problem."""
    per_elem = in_item + out_item                        # read + write bytes per element
    target = max(1 << 20, vmem_cap // 16)                # ~4 MiB (v7x) / ~8 MiB (v5e/v6e)

    # Flat-axis chunk candidates: lane-aligned divisors of L*D covering >= 2 rows.
    tc_divs = sorted(
        (c for c in range(128, LD, 128) if LD % c == 0 and c >= 2 * D), reverse=True
    )

    TC = LD
    if LD * per_elem > target:
        fitting = [c for c in tc_divs if c * per_elem <= target]
        if fitting:
            TC = fitting[0]
        elif tc_divs:
            TC = tc_divs[-1]                             # smallest valid chunk
        # else: no clean lane-aligned divisor -> keep TC = LD (vmem_limit raised below)

    # Batch tile: full Bf if it fits, otherwise a multiple of 8 that divides Bf.
    max_tb = max(1, target // max(1, TC * per_elem))
    if Bf <= max_tb:
        TB = Bf
    else:
        cap = max(8, (max_tb // 8) * 8)
        TB = next((t for t in range(cap, 7, -8) if Bf % t == 0), cap)

    # v7x megacore: non-trivial problems should expose >= 2 grid steps.
    if pl.cdiv(Bf, TB) * (LD // TC) == 1 and Bf * LD * per_elem >= (1 << 20):
        if tc_divs:
            TC = tc_divs[0]
        elif Bf % 16 == 0:
            TB = Bf // 2

    return TB, TC


def positional_encoding_forward(
    x: jnp.ndarray,
    encoding: jnp.ndarray,
    *,
    batch_tile: int | None = None,
    flat_tile: int | None = None,
    out_dtype=None,
) -> jnp.ndarray:
    """encoding: (max_len, d_model) table; x: (..., L, D)."""
    if x.shape[-2] == 1:
        return x
    expend = (x.ndim == 2)
    if expend:
        x = x[None]
    lead = x.shape[:-2]
    L, D = x.shape[-2], x.shape[-1]
    assert L >= 2
    LD = L * D
    Bf = int(np.prod(lead)) if lead else 1
    x2 = x.reshape((Bf, LD))                             # contiguous -> free, lane-dense

    enc0 = encoding[0].astype(jnp.float32)
    enc1 = encoding[1].astype(jnp.float32)
    # Positional slab laid out exactly like one flattened (L, D) row:
    # rows 0..L-2 -> enc[0], row L-1 -> enc[1] (source shift handled in-kernel).
    enc_slab = jnp.concatenate([jnp.tile(enc0, L - 1), enc1])[None, :]   # (1, L*D) f32

    if out_dtype is None:
        out_dtype = jnp.result_type(x2.dtype, enc_slab.dtype)            # torch promotion
    out_dtype = jnp.dtype(out_dtype)

    vmem_cap = _vmem_capacity_bytes()
    in_item = jnp.dtype(x2.dtype).itemsize
    TB, TC = _pick_tiles(Bf, LD, D, in_item, out_dtype.itemsize, vmem_cap)
    if batch_tile is not None:
        TB = batch_tile
    if flat_tile is not None:
        TC = flat_tile
    assert TB == Bf or TB % 8 == 0, "batch tile must equal Bf or be a multiple of 8"
    assert TC == LD or (TC % 128 == 0 and LD % TC == 0), "flat tile must be a lane-aligned divisor of L*D"
    assert TC >= 2 * D, "flat tile must cover at least two rows (last-row fix)"

    grid = (pl.cdiv(Bf, TB), LD // TC)

    # Double-buffered input + output blocks plus the (tiny) encoding chunk.
    block_bytes = 2 * TB * TC * (in_item + out_dtype.itemsize) + 2 * TC * 4
    vmem_limit = int(
        min(max(min(vmem_cap, 128 * 1024 * 1024) // 2, block_bytes + (1 << 21)), vmem_cap)
    )

    out = pl.pallas_call(
        functools.partial(_pe_kernel, d=D),
        out_shape=jax.ShapeDtypeStruct((Bf, LD), out_dtype),
        grid=grid,
        in_specs=[
            pl.BlockSpec((TB, TC), lambda bi, ci: (bi, ci)),
            pl.BlockSpec((1, TC), lambda bi, ci: (0, ci)),
        ],
        out_specs=pl.BlockSpec((TB, TC), lambda bi, ci: (bi, ci)),
        compiler_params=pltpu.CompilerParams(
            dimension_semantics=("parallel", "parallel"),
            vmem_limit_bytes=vmem_limit,
        ),
    )(x2, enc_slab)

    out = out.reshape(lead + (L, D))
    if expend:
        # Faithful to torch .squeeze(): drops ALL size-1 dims (would over-squeeze D==1).
        out = jnp.squeeze(out)
    return out


if __name__ == "__main__":
    key = jax.random.PRNGKey(0)
    B, L, D = 2, 8, 33                                   # d_model must be odd (see note above)
    encoding = make_encoding(D, max_len=5000)
    en = np.asarray(encoding)

    # --- 3-D f32 path ---
    x = jax.random.normal(key, (B, L, D), dtype=jnp.float32)
    out = jax.block_until_ready(positional_encoding_forward(x, encoding))
    xn = np.asarray(x)
    ref = xn + en[0][None, None, :]
    ref[:, L - 1, :] = xn[:, L - 2, :] + en[1][None, :]
    np.testing.assert_allclose(np.asarray(out), ref, rtol=1e-6, atol=1e-6)

    # --- 2-D input path (expend=True branch) ---
    x2d = jax.random.normal(jax.random.PRNGKey(1), (L, D), dtype=jnp.float32)
    out2d = jax.block_until_ready(positional_encoding_forward(x2d, encoding))
    ref2d = np.asarray(x2d) + en[0][None, :]
    ref2d[L - 1, :] = np.asarray(x2d)[L - 2, :] + en[1]
    np.testing.assert_allclose(np.asarray(out2d), ref2d, rtol=1e-6, atol=1e-6)

    # --- bf16 input, forced multi-tile grid (exercises pl.when last-chunk fix,
    #     lane-aligned flat chunking and batch-tiled pipeline) ---
    Bb, Lb = 16, 128                                     # L*D = 4224 = 33 * 128
    xb = jax.random.normal(jax.random.PRNGKey(2), (Bb, Lb, D), dtype=jnp.bfloat16)
    outb = jax.block_until_ready(
        positional_encoding_forward(xb, encoding, batch_tile=8, flat_tile=1408)
    )
    xbf = np.asarray(xb).astype(np.float32)
    refb = xbf + en[0][None, None, :]
    refb[:, Lb - 1, :] = xbf[:, Lb - 2, :] + en[1][None, :]
    np.testing.assert_allclose(np.asarray(outb), refb, rtol=1e-5, atol=1e-5)

    # --- seq length 1 fast path (identity) ---
    x1 = jax.random.normal(jax.random.PRNGKey(3), (B, 1, D), dtype=jnp.float32)
    np.testing.assert_allclose(
        np.asarray(positional_encoding_forward(x1, encoding)), np.asarray(x1)
    )

    print("KERNEL_OK")
</pallas_src>

<mosaic_0001>
module attributes {stable_mosaic.version = 11 : i64} {
  func.func @_pe_kernel(%arg0: i32, %arg1: i32, %arg2: memref<2x264xf32, #tpu.memory_space<vmem>>, %arg3: memref<1x264xf32, #tpu.memory_space<vmem>>, %arg4: memref<2x264xf32, #tpu.memory_space<vmem>>) attributes {dimension_semantics = [#tpu.dimension_semantics<parallel>, #tpu.dimension_semantics<parallel>], iteration_bounds = array<i64: 1, 1>, scalar_prefetch = 0 : i64, scratch_operands = 0 : i64, tpu.core_type = #tpu.core_type<tc>, window_params = [{transform_indices = @transform_0, window_bounds = array<i64: 2, 264>}, {transform_indices = @transform_1, window_bounds = array<i64: 1, 264>}, {transform_indices = @transform_2, window_bounds = array<i64: 2, 264>}]} {
    %c0 = arith.constant 0 : index
    %c0_0 = arith.constant 0 : index
    %0 = vector.load %arg2[%c0, %c0_0] : memref<2x264xf32, #tpu.memory_space<vmem>>, vector<2x264xf32>
    %c0_1 = arith.constant 0 : index
    %c0_2 = arith.constant 0 : index
    %1 = vector.load %arg3[%c0_1, %c0_2] : memref<1x264xf32, #tpu.memory_space<vmem>>, vector<1x264xf32>
    %2 = vector.broadcast %1 : vector<1x264xf32> to vector<2x264xf32>
    %3 = arith.addf %0, %2 : vector<2x264xf32>
    %c0_3 = arith.constant 0 : index
    %c0_4 = arith.constant 0 : index
    %4 = vector.load %arg4[%c0_3, %c0_4] : memref<2x264xf32, #tpu.memory_space<vmem>>, vector<2x264xf32>
    tpu.vector_store %arg4[%c0_3, %c0_4], %3 {strides = array<i32>} : memref<2x264xf32, #tpu.memory_space<vmem>>, vector<2x264xf32>,
    %c0_i32 = arith.constant 0 : i32
    %5 = arith.cmpi eq, %arg1, %c0_i32 : i32
    %6 = arith.extui %5 : i1 to i32
    %c0_i32_5 = arith.constant 0 : i32
    %7 = arith.cmpi ne, %6, %c0_i32_5 : i32
    scf.if %7 {
      %c0_6 = arith.constant 0 : index
      %c198 = arith.constant 198 : index
      %8 = vector.load %arg2[%c0_6, %c198] : memref<2x264xf32, #tpu.memory_space<vmem>>, vector<2x33xf32>
      %c0_7 = arith.constant 0 : index
      %c231 = arith.constant 231 : index
      %9 = vector.load %arg3[%c0_7, %c231] : memref<1x264xf32, #tpu.memory_space<vmem>>, vector<1x33xf32>
      %10 = vector.broadcast %9 : vector<1x33xf32> to vector<2x33xf32>
      %11 = arith.addf %8, %10 : vector<2x33xf32>
      %c0_8 = arith.constant 0 : index
      %c231_9 = arith.constant 231 : index
      %12 = vector.load %arg4[%c0_8, %c231_9] : memref<2x264xf32, #tpu.memory_space<vmem>>, vector<2x33xf32>
      tpu.vector_store %arg4[%c0_8, %c231_9], %11 {strides = array<i32>} : memref<2x264xf32, #tpu.memory_space<vmem>>, vector<2x33xf32>,
    } else {
    }
    return
  }
  func.func @transform_0(%arg0: i32, %arg1: i32) -> (i32, i32) {
    %c0_i32 = arith.constant 0 : i32
    return %arg0, %arg1 : i32, i32
  }
  func.func @transform_1(%arg0: i32, %arg1: i32) -> (i32, i32) {
    %c0_i32 = arith.constant 0 : i32
    %c0_i32_0 = arith.constant 0 : i32
    return %c0_i32, %arg1 : i32, i32
  }
  func.func @transform_2(%arg0: i32, %arg1: i32) -> (i32, i32) {
    %c0_i32 = arith.constant 0 : i32
    return %arg0, %arg1 : i32, i32
  }
}

</mosaic_0001>

<llo_original>
// kernel: tpu_custom_call.1
$region0: #{tpu_custom_call.1}
  #allocation0 [shape = 'u32[]', space=smem, size = 0x4, offset = 0x4, fixed_abs, tag = 'smem constant byte address 0x4 - core index']
  #allocation1 [shape = 'u32[144,128]{1,0:T(1,128)}', space=vmem, size = 0x12000, scoped, tag = 'internal scratch']
  %s0 = inlined_call_operand.hbm [shape: f32[2,264], index: 0, kind: input, shape index: {}]
  %s1 = inlined_call_operand.vmem [shape: f32[1,264], index: 1, kind: input, shape index: {}]
  %s2 = inlined_call_operand.hbm [shape: f32[2,264], index: 2, kind: output, shape index: {}]
  %s3 = sld [smem:[#allocation0]]
  $region26: #{tpu_custom_call.1} parent=0
    _
  %s5 = ssub.s32 1, %s3
  %s6 = scalar_select 0, %s5, %s3
  $region1: #{tpu_custom_call.1} parent=0
    #allocation2 [shape = 'u8[3072]{0}', space=vmem, size = 0xc00, scoped, tag = 'input window, operand 0, single buffered']
    #allocation3 [shape = 's32[1]{0}', space=sflag, size = 0x4, scoped, tag = 'scoped memory for tpu_custom_call.1']
    #allocation4 [shape = 's32[1]{0}', space=sflag, size = 0x4, scoped, tag = 'scoped memory for tpu_custom_call.1']
    #allocation5 [shape = 'u8[3072]{0}', space=vmem, size = 0xc00, scoped, tag = 'output window, operand 0, single buffered']
    %7 = vsyncpa [#allocation3], 0
    %8 = vsyncpa [#allocation4], 0
    // Predicated region
    $region2: #{tpu_custom_call.1} parent=1 // pred_check
      _
    $region3: #{tpu_custom_call.1} parent=1 // pred_check_branch
      %10 = sbr.rel (0) target = $region5
    $region4: #{tpu_custom_call.1} parent=1 // pred_region
      %s12 = ssub.s32 96, 96
      %13 = vsyncadd [#allocation3], %s12
      %s15 = sshll.u32 [#allocation2], 4
      %s16 = int_to_ptr.vmem [resolvable:$true] %s15
      %18 = dma.hbm_to_vmem [thread:$0]  %s0, 96, %s16, [#allocation3]
    $region5: #{tpu_custom_call.1} parent=1 // pred_fallthru
      _
    // Predicated region
    $region6: #{tpu_custom_call.1} parent=1 // pred_check
      _
    $region7: #{tpu_custom_call.1} parent=1 // pred_check_branch
      %20 = sbr.rel (0) target = $region9
    $region8: #{tpu_custom_call.1} parent=1 // pred_region
      _
    $region9: #{tpu_custom_call.1} parent=1 // pred_fallthru
      _
    // Predicated region
    $region10: #{tpu_custom_call.1} parent=1 // pred_check
      _
    $region11: #{tpu_custom_call.1} parent=1 // pred_check_branch
      %22 = sbr.rel (0) target = $region13
    $region12: #{tpu_custom_call.1} parent=1 // pred_region
      %23 = dma.done [#allocation3], 96
    $region13: #{tpu_custom_call.1} parent=1 // pred_fallthru
      _
    %v24 = vld [vmem:[#allocation2] sm:$0x3f]
    %v25 = vld [vmem:[%s1] sm:$0x7]
    %v27 = vlaneseq
    %v28 = vshrl.u32 %v27, 7
    %v29 = vsub.s32 0, %v28
    %v30 = vrot.slane %v25, %v29
    %v31 = vlaneseq
    %v32 = vshrl.u32 %v31, 7
    %v33 = vsub.s32 1, %v32
    %v34 = vrot.slane %v25, %v33
    %v35 = vlaneseq
    %v36 = vshrl.u32 %v35, 7
    %v37 = vsub.s32 2, %v36
    %v38 = vrot.slane %v25, %v37
    %v39 = vcombine.low %v30, %v34
    %v41 = vunpack.c.l.s4 1983009808
    %v42 = vunpack.c.0.s8 %v41
    %v43 = vlaneseq
    %v44 = vshrl.u32 %v43, 7
    %v45 = vsub.s32 %v42, %v44
    %v46 = vrot.slane %v39, %v45
    %v48 = vunpack.c.l.s4 1983009808
    %v49 = vunpack.c.0.s8 %v48
    %v50 = vlaneseq
    %v51 = vshrl.u32 %v50, 7
    %v52 = vsub.s32 %v49, %v51
    %v53 = vrot.slane %v38, %v52
    %v54 = vcombine.low %v46, %v53
    %v56 = vadd.f32 %v24, %v54
    %vm57 = vcmask 1041408
    %vm58 = vcmask 1043458
    %vm59 = vmor %vm58, %vm57
    %vm60 = vcmask 62468
    %vm61 = vmor %vm60, %vm59
    %62 = vst.msk [vmem:[#allocation5] sm:$0x3f] %vm61, %v56
    %p63 = scmp.eq.s32.totalorder 0, 0
    // Predicated region
    $region14: #{tpu_custom_call.1} parent=1 // pred_check
      %p64 = pneg %p63
    $region15: #{tpu_custom_call.1} parent=1 // pred_check_branch
      %66 = sbr.rel (%p64) target = $region17
    $region16: #{tpu_custom_call.1} parent=1 // pred_region
      %v67 = vld [vmem:[#allocation2 + $0x2] sm:$0x3]
      %v68 = vld [vmem:[%s1 + $0x1] sm:$0x3]
      %v70 = vlaneseq
      %v71 = vshrl.u32 %v70, 7
      %v72 = vsub.s32 0, %v71
      %v73 = vrot.slane %v68, %v72
      %v74 = vlaneseq
      %v75 = vshrl.u32 %v74, 7
      %v76 = vsub.s32 1, %v75
      %v77 = vrot.slane %v68, %v76
      %v78 = vcombine.low %v73, %v77
      %v80 = vunpack.c.l.s4 1983009808
      %v81 = vunpack.c.0.s8 %v80
      %v82 = vlaneseq
      %v83 = vshrl.u32 %v82, 7
      %v84 = vsub.s32 %v81, %v83
      %v85 = vrot.slane %v78, %v84
      %86 = vrot.lane.b32.xlu0 %v85, 95
      %v87 = vpop.permute.xlu0 %86
      %v88 = vrot.slane %v87, 2
      %vm89 = vcmask 777216
      %v90 = vsel %vm89, %v87, %v88
      %v92 = vadd.f32 %v67, %v90
      %94 = vrot.lane.b32.xlu0 %v92, 33
      %v95 = vpop.permute.xlu0 %94
      %v96 = vrot.slane %v95, 6
      %vm97 = vcmask 269312
      %v98 = vsel %vm97, %v96, %v95
      %vm100 = vcmask 1042232
      %vm101 = vcmask 60418
      %vm102 = vmor %vm101, %vm100
      %103 = vst.msk [vmem:[#allocation5 + $0x2] sm:$0xf] %vm102, %v98
    $region17: #{tpu_custom_call.1} parent=1 // pred_fallthru
      _
    // Predicated region
    $region18: #{tpu_custom_call.1} parent=1 // pred_check
      _
    $region19: #{tpu_custom_call.1} parent=1 // pred_check_branch
      %105 = sbr.rel (0) target = $region21
    $region20: #{tpu_custom_call.1} parent=1 // pred_region
      %s107 = ssub.s32 96, 96
      %108 = vsyncadd [#allocation4], %s107
      %s110 = sshll.u32 [#allocation5], 4
      %s111 = int_to_ptr.vmem [resolvable:$true] %s110
      %113 = dma.vmem_to_hbm [thread:$0]  %s111, 96, %s2, [#allocation4]
    $region21: #{tpu_custom_call.1} parent=1 // pred_fallthru
      _
    // Predicated region
    $region22: #{tpu_custom_call.1} parent=1 // pred_check
      _
    $region23: #{tpu_custom_call.1} parent=1 // pred_check_branch
      %115 = sbr.rel (0) target = $region25
    $region24: #{tpu_custom_call.1} parent=1 // pred_region
      %116 = dma.done [#allocation4], 96
    $region25: #{tpu_custom_call.1} parent=1 // pred_fallthru
      _
    %117 = vsyncpa [#allocation3], 1
    %118 = vsyncpa [#allocation4], 1

</llo_original>
